<compile_context>
chip_gen: v7x
topology: tpu7x:2x2x1
jax: 0.10.0
libtpu: 0.0.40
codegen_flags: <defaults>
</compile_context>

<pallas_src>
import jax
import jax.numpy as jnp
from jax.experimental import pallas as pl
from jax.experimental.pallas import tpu as pltpu


def cross_attention_kernel(s2_ref, s1_ref, qbid_ref, kbid_ref,
                           wq_ref, wk_ref, wv_ref, wo_ref, bo_ref, out_ref):
    """One batch block.

    s2_ref:   (Bt*Lq, Dq)   queries  (batch folded into M in the wrapper)
    s1_ref:   (Bt*Lk, Dc)   encoder states
    qbid_ref: (Bt*Lq, 1)    local batch id per query row   (int32)
    kbid_ref: (1, Bt*Lk)    local batch id per key column  (int32)
    """
    cdt = s2_ref.dtype                      # compute dtype (bf16 in production)

    # --- projections (MXU, f32 accumulation) --------------------------------
    q = jnp.dot(s2_ref[...], wq_ref[...], preferred_element_type=jnp.float32)
    k = jnp.dot(s1_ref[...], wk_ref[...], preferred_element_type=jnp.float32)
    v = jnp.dot(s1_ref[...], wv_ref[...], preferred_element_type=jnp.float32)

    # --- block-diagonal attention scores: ONE 2-D matmul over the batch -----
    # scores[r, c] only matters when row r and column c belong to the same
    # batch element; cross-batch entries get masked out before the softmax.
    scores = jax.lax.dot_general(
        q.astype(cdt), k.astype(cdt),
        dimension_numbers=(((1,), (1,)), ((), ())),
        preferred_element_type=jnp.float32)            # (Bt*Lq, Bt*Lk), f32

    same_batch = qbid_ref[...] == kbid_ref[...]        # broadcast -> (Mq, Mk)
    scores = jnp.where(same_batch, scores, jnp.float32(-1e30))

    # --- UNscaled softmax over keys (matches torch.softmax(q @ k^T)) --------
    # NOTE: no 1/sqrt(d) factor -- this is intentional (pyannote module).
    m = jnp.max(scores, axis=-1, keepdims=True)
    e = jnp.exp(scores - m)                              # masked entries -> 0
    attn = e / jnp.sum(e, axis=-1, keepdims=True)        # exact divide, f32

    # --- context + output projection ----------------------------------------
    ctx = jnp.dot(attn.astype(cdt), v.astype(cdt),
                  preferred_element_type=jnp.float32)    # (Bt*Lq, Di)
    out = jnp.dot(ctx.astype(cdt), wo_ref[...],
                  preferred_element_type=jnp.float32)    # (Bt*Lq, Dq)
    out = out + bo_ref[...]                              # bias (1, Dq), f32
    out_ref[...] = out.astype(out_ref.dtype)


def cross_attention(s1, s2, wq, wk, wv, wo, bo, *,
                    compute_dtype=jnp.bfloat16, batch_block=None):
    """s1: (B, Lk, Dc) encoder states; s2: (B, Lq, Dq) queries.
    wq: (Dq, Di), wk/wv: (Dc, Di), wo: (Di, Dq), bo: (Dq,) or (1, Dq).
    Returns (B, Lq, Dq) in compute_dtype."""
    B, Lq, Dq = s2.shape
    _, Lk, Dc = s1.shape
    Di = wq.shape[1]

    if batch_block is None:
        # >= 2 blocks so ("parallel",) can use both v7x TensorCores and so the
        # BlockSpec pipeline overlaps DMA with compute; keep the block-diag
        # scores matrix (Bt*Lq x Bt*Lk) modest.
        batch_block = B // 2 if (B >= 2 and B % 2 == 0) else B
        while batch_block > 1 and batch_block * max(Lq, Lk) > 512:
            batch_block = batch_block // 2 if batch_block % 2 == 0 else 1
    assert B % batch_block == 0
    num_blocks = B // batch_block

    # bf16 (or requested) I/O: halves HBM traffic, native MXU throughput.
    # Batch fold done here (free metadata reshape on contiguous HBM).
    s2_2d = s2.reshape(B * Lq, Dq).astype(compute_dtype)
    s1_2d = s1.reshape(B * Lk, Dc).astype(compute_dtype)
    wq_c = wq.astype(compute_dtype)
    wk_c = wk.astype(compute_dtype)
    wv_c = wv.astype(compute_dtype)
    wo_c = wo.astype(compute_dtype)
    bo_f32 = jnp.reshape(bo, (1, Dq)).astype(jnp.float32)   # tiny, keep exact

    # Block-local batch ids for the block-diagonal mask (same for every grid
    # block, so their index_map is constant and their block == full array).
    q_lbid = jnp.repeat(jnp.arange(batch_block, dtype=jnp.int32),
                        Lq).reshape(batch_block * Lq, 1)
    k_lbid = jnp.repeat(jnp.arange(batch_block, dtype=jnp.int32),
                        Lk).reshape(1, batch_block * Lk)

    itemsize = jnp.dtype(compute_dtype).itemsize
    flops = 2 * B * (Lq * Dq * Di            # q projection
                     + 2 * Lk * Dc * Di      # k, v projections
                     + 2 * Lq * Lk * Di      # scores + context
                     + Lq * Di * Dq)         # output projection
    bytes_accessed = int(
        (B * Lq * Dq + B * Lk * Dc) * itemsize                  # S2, S1 in
        + (Dq * Di + 2 * Dc * Di + Di * Dq) * itemsize          # weights
        + Dq * 4                                                # bias (f32)
        + B * Lq * Dq * itemsize)                               # output

    out_2d = pl.pallas_call(
        cross_attention_kernel,
        out_shape=jax.ShapeDtypeStruct((B * Lq, Dq), compute_dtype),
        grid_spec=pltpu.PrefetchScalarGridSpec(
            num_scalar_prefetch=0,
            grid=(num_blocks,),
            in_specs=[
                pl.BlockSpec((batch_block * Lq, Dq), lambda b: (b, 0)),   # S2
                pl.BlockSpec((batch_block * Lk, Dc), lambda b: (b, 0)),   # S1
                pl.BlockSpec((batch_block * Lq, 1), lambda b: (0, 0)),    # q batch ids
                pl.BlockSpec((1, batch_block * Lk), lambda b: (0, 0)),    # k batch ids
                pl.BlockSpec((Dq, Di), lambda b: (0, 0)),                 # Wq
                pl.BlockSpec((Dc, Di), lambda b: (0, 0)),                 # Wk
                pl.BlockSpec((Dc, Di), lambda b: (0, 0)),                 # Wv
                pl.BlockSpec((Di, Dq), lambda b: (0, 0)),                 # Wout
                pl.BlockSpec((1, Dq), lambda b: (0, 0)),                  # bout
            ],
            out_specs=pl.BlockSpec((batch_block * Lq, Dq), lambda b: (b, 0)),
        ),
        compiler_params=pltpu.CompilerParams(
            dimension_semantics=("parallel",)),
        cost_estimate=pl.CostEstimate(
            flops=int(flops),
            transcendentals=int(B * Lq * Lk),
            bytes_accessed=bytes_accessed),
    )(s2_2d, s1_2d, q_lbid, k_lbid, wq_c, wk_c, wv_c, wo_c, bo_f32)

    return out_2d.reshape(B, Lq, Dq)


def reference(s1, s2, wq, wk, wv, wo, bo):
    q = jnp.einsum("bld,de->ble", s2, wq)
    k = jnp.einsum("bld,de->ble", s1, wk)
    v = jnp.einsum("bld,de->ble", s1, wv)
    scores = jnp.einsum("bqe,bke->bqk", q, k)        # unscaled, like the module
    attn = jax.nn.softmax(scores, axis=-1)
    ctx = jnp.einsum("bqk,bke->bqe", attn, v)
    return jnp.einsum("bqe,ed->bqd", ctx, wo) + jnp.reshape(bo, (1, 1, -1))


if __name__ == "__main__":
    # Module config: query_dim=32, cross_attention_dim=32 -> inner_dim=64.
    query_dim = 32
    cross_dim = 32
    inner_dim = query_dim * 2
    B, Lq, Lk = 2, 8, 8

    key = jax.random.PRNGKey(0)
    k1, k2, k3, k4, k5, k6, k7 = jax.random.split(key, 7)

    # nn.Linear weights stored transposed as (in, out).
    wq = jax.random.normal(k1, (query_dim, inner_dim), jnp.float32) * 0.1
    wk = jax.random.normal(k2, (cross_dim, inner_dim), jnp.float32) * 0.1
    wv = jax.random.normal(k3, (cross_dim, inner_dim), jnp.float32) * 0.1
    wo = jax.random.normal(k4, (inner_dim, query_dim), jnp.float32) * 0.1
    bo = jax.random.normal(k5, (1, query_dim), jnp.float32) * 0.1

    S1 = jax.random.normal(k6, (B, Lk, cross_dim), jnp.float32)   # encoder states
    S2 = jax.random.normal(k7, (B, Lq, query_dim), jnp.float32)   # queries

    ref = reference(S1, S2, wq, wk, wv, wo, bo)

    # f32 path: tight semantic check (same kernel code path as production).
    out_f32 = cross_attention(S1, S2, wq, wk, wv, wo, bo,
                              compute_dtype=jnp.float32)
    out_f32 = jax.block_until_ready(out_f32)
    assert out_f32.shape == (B, Lq, query_dim)
    assert jnp.allclose(out_f32, ref, atol=2e-3, rtol=2e-3)

    # bf16 production path: bf16 I/O + MXU, f32 accumulation, f32 softmax.
    out_bf16 = cross_attention(S1, S2, wq, wk, wv, wo, bo)   # default bf16
    out_bf16 = jax.block_until_ready(out_bf16)
    assert out_bf16.shape == (B, Lq, query_dim)
    assert out_bf16.dtype == jnp.bfloat16
    assert jnp.allclose(out_bf16.astype(jnp.float32), ref, atol=1e-1, rtol=1e-1)

    print("KERNEL_OK")
</pallas_src>

<mosaic_0001>
module attributes {stable_mosaic.version = 11 : i64} {
  func.func @cross_attention_kernel(%arg0: i32, %arg1: memref<8x32xf32, #tpu.memory_space<vmem>>, %arg2: memref<8x32xf32, #tpu.memory_space<vmem>>, %arg3: memref<8x1xi32, #tpu.memory_space<vmem>>, %arg4: memref<1x8xi32, #tpu.memory_space<vmem>>, %arg5: memref<32x64xf32, #tpu.memory_space<vmem>>, %arg6: memref<32x64xf32, #tpu.memory_space<vmem>>, %arg7: memref<32x64xf32, #tpu.memory_space<vmem>>, %arg8: memref<64x32xf32, #tpu.memory_space<vmem>>, %arg9: memref<1x32xf32, #tpu.memory_space<vmem>>, %arg10: memref<8x32xf32, #tpu.memory_space<vmem>>) attributes {dimension_semantics = [#tpu.dimension_semantics<parallel>], iteration_bounds = array<i64: 2>, scalar_prefetch = 0 : i64, scratch_operands = 0 : i64, tpu.core_type = #tpu.core_type<tc>, window_params = [{transform_indices = @transform_0, window_bounds = array<i64: 8, 32>}, {transform_indices = @transform_1, window_bounds = array<i64: 8, 32>}, {pipeline_mode = #tpu.pipeline_mode<synchronous>, transform_indices = @transform_2, window_bounds = array<i64: 8, 1>}, {pipeline_mode = #tpu.pipeline_mode<synchronous>, transform_indices = @transform_3, window_bounds = array<i64: 1, 8>}, {pipeline_mode = #tpu.pipeline_mode<synchronous>, transform_indices = @transform_4, window_bounds = array<i64: 32, 64>}, {pipeline_mode = #tpu.pipeline_mode<synchronous>, transform_indices = @transform_5, window_bounds = array<i64: 32, 64>}, {pipeline_mode = #tpu.pipeline_mode<synchronous>, transform_indices = @transform_6, window_bounds = array<i64: 32, 64>}, {pipeline_mode = #tpu.pipeline_mode<synchronous>, transform_indices = @transform_7, window_bounds = array<i64: 64, 32>}, {pipeline_mode = #tpu.pipeline_mode<synchronous>, transform_indices = @transform_8, window_bounds = array<i64: 1, 32>}, {transform_indices = @transform_9, window_bounds = array<i64: 8, 32>}]} {
    %c0 = arith.constant 0 : index
    %c0_0 = arith.constant 0 : index
    %0 = vector.load %arg1[%c0, %c0_0] : memref<8x32xf32, #tpu.memory_space<vmem>>, vector<8x32xf32>
    %c0_1 = arith.constant 0 : index
    %c0_2 = arith.constant 0 : index
    %1 = vector.load %arg5[%c0_1, %c0_2] : memref<32x64xf32, #tpu.memory_space<vmem>>, vector<32x64xf32>
    %cst = arith.constant dense<0.000000e+00> : vector<8x64xf32>
    %2 = tpu.matmul %0, %1, %cst {dimension_numbers = #tpu.dot_dimension_numbers<[1], [0], [0], [1], [0, 0, 1, 1], [], []>} : vector<8x32xf32>, vector<32x64xf32>, vector<8x64xf32> -> vector<8x64xf32>
    %c0_3 = arith.constant 0 : index
    %c0_4 = arith.constant 0 : index
    %3 = vector.load %arg2[%c0_3, %c0_4] : memref<8x32xf32, #tpu.memory_space<vmem>>, vector<8x32xf32>
    %c0_5 = arith.constant 0 : index
    %c0_6 = arith.constant 0 : index
    %4 = vector.load %arg6[%c0_5, %c0_6] : memref<32x64xf32, #tpu.memory_space<vmem>>, vector<32x64xf32>
    %cst_7 = arith.constant dense<0.000000e+00> : vector<8x64xf32>
    %5 = tpu.matmul %3, %4, %cst_7 {dimension_numbers = #tpu.dot_dimension_numbers<[1], [0], [0], [1], [0, 0, 1, 1], [], []>} : vector<8x32xf32>, vector<32x64xf32>, vector<8x64xf32> -> vector<8x64xf32>
    %c0_8 = arith.constant 0 : index
    %c0_9 = arith.constant 0 : index
    %6 = vector.load %arg2[%c0_8, %c0_9] : memref<8x32xf32, #tpu.memory_space<vmem>>, vector<8x32xf32>
    %c0_10 = arith.constant 0 : index
    %c0_11 = arith.constant 0 : index
    %7 = vector.load %arg7[%c0_10, %c0_11] : memref<32x64xf32, #tpu.memory_space<vmem>>, vector<32x64xf32>
    %cst_12 = arith.constant dense<0.000000e+00> : vector<8x64xf32>
    %8 = tpu.matmul %6, %7, %cst_12 {dimension_numbers = #tpu.dot_dimension_numbers<[1], [0], [0], [1], [0, 0, 1, 1], [], []>} : vector<8x32xf32>, vector<32x64xf32>, vector<8x64xf32> -> vector<8x64xf32>
    %cst_13 = arith.constant dense<0.000000e+00> : vector<8x8xf32>
    %9 = tpu.matmul %2, %5, %cst_13 {dimension_numbers = #tpu.dot_dimension_numbers<[1], [1], [0], [0], [0, 0, 1, 0], [], []>} : vector<8x64xf32>, vector<8x64xf32>, vector<8x8xf32> -> vector<8x8xf32>
    %c0_14 = arith.constant 0 : index
    %c0_15 = arith.constant 0 : index
    %10 = vector.load %arg3[%c0_14, %c0_15] : memref<8x1xi32, #tpu.memory_space<vmem>>, vector<8x1xi32>
    %c0_16 = arith.constant 0 : index
    %c0_17 = arith.constant 0 : index
    %11 = vector.load %arg4[%c0_16, %c0_17] : memref<1x8xi32, #tpu.memory_space<vmem>>, vector<1x8xi32>
    %12 = vector.broadcast %10 : vector<8x1xi32> to vector<8x8xi32>
    %13 = vector.broadcast %11 : vector<1x8xi32> to vector<8x8xi32>
    %14 = arith.cmpi eq, %12, %13 : vector<8x8xi32>
    %cst_18 = arith.constant -1.000000e+30 : f32
    %15 = vector.broadcast %cst_18 : f32 to vector<8x8xf32>
    %16 = arith.select %14, %9, %15 : vector<8x8xi1>, vector<8x8xf32>
    %cst_19 = arith.constant dense<0xFF800000> : vector<8xf32>
    %17 = vector.multi_reduction <maximumf>, %16, %cst_19 [1] : vector<8x8xf32> to vector<8xf32>
    %18 = vector.shape_cast %17 : vector<8xf32> to vector<8x1xf32>
    %19 = vector.broadcast %18 : vector<8x1xf32> to vector<8x8xf32>
    %20 = arith.subf %16, %19 : vector<8x8xf32>
    %21 = math.exp %20 : vector<8x8xf32>
    %cst_20 = arith.constant dense<0.000000e+00> : vector<8xf32>
    %22 = vector.multi_reduction <add>, %21, %cst_20 [1] : vector<8x8xf32> to vector<8xf32>
    %23 = vector.shape_cast %22 : vector<8xf32> to vector<8x1xf32>
    %24 = vector.broadcast %23 : vector<8x1xf32> to vector<8x8xf32>
    %25 = arith.divf %21, %24 : vector<8x8xf32>
    %cst_21 = arith.constant dense<0.000000e+00> : vector<8x64xf32>
    %26 = tpu.matmul %25, %8, %cst_21 {dimension_numbers = #tpu.dot_dimension_numbers<[1], [0], [0], [1], [0, 0, 1, 1], [], []>} : vector<8x8xf32>, vector<8x64xf32>, vector<8x64xf32> -> vector<8x64xf32>
    %c0_22 = arith.constant 0 : index
    %c0_23 = arith.constant 0 : index
    %27 = vector.load %arg8[%c0_22, %c0_23] : memref<64x32xf32, #tpu.memory_space<vmem>>, vector<64x32xf32>
    %cst_24 = arith.constant dense<0.000000e+00> : vector<8x32xf32>
    %28 = tpu.matmul %26, %27, %cst_24 {dimension_numbers = #tpu.dot_dimension_numbers<[1], [0], [0], [1], [0, 0, 1, 1], [], []>} : vector<8x64xf32>, vector<64x32xf32>, vector<8x32xf32> -> vector<8x32xf32>
    %c0_25 = arith.constant 0 : index
    %c0_26 = arith.constant 0 : index
    %29 = vector.load %arg9[%c0_25, %c0_26] : memref<1x32xf32, #tpu.memory_space<vmem>>, vector<1x32xf32>
    %30 = vector.broadcast %29 : vector<1x32xf32> to vector<8x32xf32>
    %31 = arith.addf %28, %30 : vector<8x32xf32>
    %c0_27 = arith.constant 0 : index
    %c0_28 = arith.constant 0 : index
    %32 = vector.load %arg10[%c0_27, %c0_28] : memref<8x32xf32, #tpu.memory_space<vmem>>, vector<8x32xf32>
    tpu.vector_store %arg10[%c0_27, %c0_28], %31 {strides = array<i32>} : memref<8x32xf32, #tpu.memory_space<vmem>>, vector<8x32xf32>,
    return
  }
  func.func @transform_0(%arg0: i32) -> (i32, i32) {
    %c0_i32 = arith.constant 0 : i32
    %c0_i32_0 = arith.constant 0 : i32
    return %arg0, %c0_i32 : i32, i32
  }
  func.func @transform_1(%arg0: i32) -> (i32, i32) {
    %c0_i32 = arith.constant 0 : i32
    %c0_i32_0 = arith.constant 0 : i32
    return %arg0, %c0_i32 : i32, i32
  }
  func.func @transform_2(%arg0: i32) -> (i32, i32) {
    %c0_i32 = arith.constant 0 : i32
    %c0_i32_0 = arith.constant 0 : i32
    %c0_i32_1 = arith.constant 0 : i32
    return %c0_i32, %c0_i32_0 : i32, i32
  }
  func.func @transform_3(%arg0: i32) -> (i32, i32) {
    %c0_i32 = arith.constant 0 : i32
    %c0_i32_0 = arith.constant 0 : i32
    %c0_i32_1 = arith.constant 0 : i32
    return %c0_i32, %c0_i32_0 : i32, i32
  }
  func.func @transform_4(%arg0: i32) -> (i32, i32) {
    %c0_i32 = arith.constant 0 : i32
    %c0_i32_0 = arith.constant 0 : i32
    %c0_i32_1 = arith.constant 0 : i32
    return %c0_i32, %c0_i32_0 : i32, i32
  }
  func.func @transform_5(%arg0: i32) -> (i32, i32) {
    %c0_i32 = arith.constant 0 : i32
    %c0_i32_0 = arith.constant 0 : i32
    %c0_i32_1 = arith.constant 0 : i32
    return %c0_i32, %c0_i32_0 : i32, i32
  }
  func.func @transform_6(%arg0: i32) -> (i32, i32) {
    %c0_i32 = arith.constant 0 : i32
    %c0_i32_0 = arith.constant 0 : i32
    %c0_i32_1 = arith.constant 0 : i32
    return %c0_i32, %c0_i32_0 : i32, i32
  }
  func.func @transform_7(%arg0: i32) -> (i32, i32) {
    %c0_i32 = arith.constant 0 : i32
    %c0_i32_0 = arith.constant 0 : i32
    %c0_i32_1 = arith.constant 0 : i32
    return %c0_i32, %c0_i32_0 : i32, i32
  }
  func.func @transform_8(%arg0: i32) -> (i32, i32) {
    %c0_i32 = arith.constant 0 : i32
    %c0_i32_0 = arith.constant 0 : i32
    %c0_i32_1 = arith.constant 0 : i32
    return %c0_i32, %c0_i32_0 : i32, i32
  }
  func.func @transform_9(%arg0: i32) -> (i32, i32) {
    %c0_i32 = arith.constant 0 : i32
    %c0_i32_0 = arith.constant 0 : i32
    return %arg0, %c0_i32 : i32, i32
  }
}

</mosaic_0001>

<llo_original>
// kernel: tpu_custom_call.1
$region0: #{tpu_custom_call.1}
  #allocation0 [shape = 'u32[]', space=smem, size = 0x4, offset = 0x4, fixed_abs, tag = 'smem constant byte address 0x4 - core index']
  #allocation1 [shape = 'u32[144,128]{1,0:T(1,128)}', space=vmem, size = 0x12000, scoped, tag = 'internal scratch']
  %s0 = inlined_call_operand.hbm [shape: f32[16,32], index: 0, kind: input, shape index: {}]
  %s1 = inlined_call_operand.hbm [shape: f32[16,32], index: 1, kind: input, shape index: {}]
  %s2 = inlined_call_operand.vmem [shape: s32[8,1], index: 2, kind: input, shape index: {}]
  %s3 = inlined_call_operand.vmem [shape: s32[1,8], index: 3, kind: input, shape index: {}]
  %s4 = inlined_call_operand.vmem [shape: f32[32,64], index: 4, kind: input, shape index: {}]
  %s5 = inlined_call_operand.vmem [shape: f32[32,64], index: 5, kind: input, shape index: {}]
  %s6 = inlined_call_operand.vmem [shape: f32[32,64], index: 6, kind: input, shape index: {}]
  %s7 = inlined_call_operand.vmem [shape: f32[64,32], index: 7, kind: input, shape index: {}]
  %s8 = inlined_call_operand.vmem [shape: f32[1,32], index: 8, kind: input, shape index: {}]
  %s9 = inlined_call_operand.hbm [shape: f32[16,32], index: 9, kind: output, shape index: {}]
  %s10 = sld [smem:[#allocation0]]
  $region77: #{tpu_custom_call.1} parent=0
    _
  %s12 = ssub.s32 1, %s10
  %s13 = scalar_select 0, %s12, %s10
  $region1: #{tpu_custom_call.1} parent=0
    #allocation2 [shape = 'u8[8192]{0}', space=vmem, size = 0x2000, scoped, tag = 'input window, operand 0']
    #allocation3 [shape = 's32[2]{0}', space=sflag, size = 0x8, scoped, tag = 'scoped memory for tpu_custom_call.1']
    #allocation4 [shape = 's32[2]{0}', space=sflag, size = 0x8, scoped, tag = 'scoped memory for tpu_custom_call.1']
    #allocation5 [shape = 'u8[8192]{0}', space=vmem, size = 0x2000, scoped, tag = 'input window, operand 1']
    #allocation6 [shape = 's32[2]{0}', space=sflag, size = 0x8, scoped, tag = 'scoped memory for tpu_custom_call.1']
    #allocation7 [shape = 'u8[8192]{0}', space=vmem, size = 0x2000, scoped, tag = 'output window, operand 0']
    %14 = vsyncpa [#allocation3], 0
    %s15 = scalar_lea.sflag [#allocation3], 1
    %16 = vsyncpa %s15, 0
    %17 = vsyncpa [#allocation6], 0
    %s18 = scalar_lea.sflag [#allocation6], 1
    %19 = vsyncpa %s18, 0
    %20 = vsyncpa [#allocation4], 0
    %s21 = scalar_lea.sflag [#allocation4], 1
    %22 = vsyncpa %s21, 0
    loop: start=0, step=1, limit=4
    $region2: #{tpu_custom_call.1} parent=1 // loop_pre_header
      _
    $region3: #{tpu_custom_call.1} parent=1 // loop_header
      %s24 = sphi 0, %s28
      %p25 = scmp.ge.s32.totalorder %s24, 4
      %s34 = sphi 0, %s36
      %s37 = sphi 0, %s34
      %s38 = sphi 0, %s37
      %s54 = sphi 0, %s38
      %s60 = sphi 0, %s62
      %s63 = sphi 0, %s60
      %s64 = sphi 0, %s63
      %s80 = sphi 0, %s64
      %s84 = sphi 0, %s84
      %s86 = sphi 0, %s84
      %s87 = sphi 0, %s86
      %s101 = sphi 0, %s87
      %s105 = sphi 0, %s105
      %s107 = sphi 0, %s105
      %s108 = sphi 0, %s107
      %s122 = sphi 0, %s108
      %s126 = sphi 0, %s126
      %s128 = sphi 0, %s126
      %s129 = sphi 0, %s128
      %s143 = sphi 0, %s129
      %s147 = sphi 0, %s147
      %s149 = sphi 0, %s147
      %s150 = sphi 0, %s149
      %s164 = sphi 0, %s150
      %s168 = sphi 0, %s168
      %s170 = sphi 0, %s168
      %s171 = sphi 0, %s170
      %s185 = sphi 0, %s171
      %s189 = sphi 0, %s189
      %s191 = sphi 0, %s189
      %s192 = sphi 0, %s191
      %s206 = sphi 0, %s192
      %s210 = sphi 0, %s210
      %s212 = sphi 0, %s210
      %s213 = sphi 0, %s212
      %s227 = sphi 0, %s213
      %s233 = sphi 0, %s235
      %s236 = sphi 0, %s233
      %s237 = sphi 0, %s236
      %s253 = sphi 0, %s237
    $region4: #{tpu_custom_call.1} parent=1 // loop_header_branch
      %27 = sbr.rel (%p25) target = $region8
    $region5: #{tpu_custom_call.1} parent=1 // loop_body
      %s29 = ssub.s32 %s24, 1
      %s30 = ssub.s32 %s24, 2
      %s31 = sadd.s32 %s24, 1
      %s32 = ssub.s32 %s24, %s31
      %p33 = scmp.eq.s32.totalorder %s32, 0
      %s35 = sadd.s32 %s34, 1
      %s36 = scalar_select %p33, %s34, %s35
      %p39 = pneg %p33
      %p40 = scmp.eq.s32.totalorder %s24, 1
      %p41 = por %p39, %p40
      %p42 = scmp.ne.s32.totalorder %s34, %s37
      %p43 = scmp.eq.s32.totalorder %s24, 0
      %p44 = por %p42, %p43
      %p45 = scmp.ne.s32.totalorder %s34, %s37
      %p46 = scmp.eq.s32.totalorder %s29, 1
      %p47 = por %p45, %p46
      %p48 = scmp.ne.s32.totalorder %s37, %s38
      %p49 = scmp.eq.s32.totalorder %s29, 0
      %p50 = por %p48, %p49
      %p51 = scmp.ne.s32.totalorder %s37, %s38
      %p52 = scmp.eq.s32.totalorder %s30, 1
      %p53 = por %p51, %p52
      %p55 = scmp.ne.s32.totalorder %s38, %s54
      %p56 = scmp.eq.s32.totalorder %s30, 0
      %p57 = por %p55, %p56
      %s58 = ssub.s32 %s24, %s31
      %p59 = scmp.eq.s32.totalorder %s58, 0
      %s61 = sadd.s32 %s60, 1
      %s62 = scalar_select %p59, %s60, %s61
      %p65 = pneg %p59
      %p66 = scmp.eq.s32.totalorder %s24, 1
      %p67 = por %p65, %p66
      %p68 = scmp.ne.s32.totalorder %s60, %s63
      %p69 = scmp.eq.s32.totalorder %s24, 0
      %p70 = por %p68, %p69
      %p71 = scmp.ne.s32.totalorder %s60, %s63
      %p72 = scmp.eq.s32.totalorder %s29, 1
      %p73 = por %p71, %p72
      %p74 = scmp.ne.s32.totalorder %s63, %s64
      %p75 = scmp.eq.s32.totalorder %s29, 0
      %p76 = por %p74, %p75
      %p77 = scmp.ne.s32.totalorder %s63, %s64
      %p78 = scmp.eq.s32.totalorder %s30, 1
      %p79 = por %p77, %p78
      %p81 = scmp.ne.s32.totalorder %s64, %s80
      %p82 = scmp.eq.s32.totalorder %s30, 0
      %p83 = por %p81, %p82
      %s85 = sadd.s32 %s84, 1
      %p88 = scmp.eq.s32.totalorder %s24, 1
      %p89 = scmp.ne.s32.totalorder %s84, %s86
      %p90 = scmp.eq.s32.totalorder %s24, 0
      %p91 = por %p89, %p90
      %p92 = scmp.ne.s32.totalorder %s84, %s86
      %p93 = scmp.eq.s32.totalorder %s29, 1
      %p94 = por %p92, %p93
      %p95 = scmp.ne.s32.totalorder %s86, %s87
      %p96 = scmp.eq.s32.totalorder %s29, 0
      %p97 = por %p95, %p96
      %p98 = scmp.ne.s32.totalorder %s86, %s87
      %p99 = scmp.eq.s32.totalorder %s30, 1
      %p100 = por %p98, %p99
      %p102 = scmp.ne.s32.totalorder %s87, %s101
      %p103 = scmp.eq.s32.totalorder %s30, 0
      %p104 = por %p102, %p103
      %s106 = sadd.s32 %s105, 1
      %p109 = scmp.eq.s32.totalorder %s24, 1
      %p110 = scmp.ne.s32.totalorder %s105, %s107
      %p111 = scmp.eq.s32.totalorder %s24, 0
      %p112 = por %p110, %p111
      %p113 = scmp.ne.s32.totalorder %s105, %s107
      %p114 = scmp.eq.s32.totalorder %s29, 1
      %p115 = por %p113, %p114
      %p116 = scmp.ne.s32.totalorder %s107, %s108
      %p117 = scmp.eq.s32.totalorder %s29, 0
      %p118 = por %p116, %p117
      %p119 = scmp.ne.s32.totalorder %s107, %s108
      %p120 = scmp.eq.s32.totalorder %s30, 1
      %p121 = por %p119, %p120
      %p123 = scmp.ne.s32.totalorder %s108, %s122
      %p124 = scmp.eq.s32.totalorder %s30, 0
      %p125 = por %p123, %p124
      %s127 = sadd.s32 %s126, 1
      %p130 = scmp.eq.s32.totalorder %s24, 1
      %p131 = scmp.ne.s32.totalorder %s126, %s128
      %p132 = scmp.eq.s32.totalorder %s24, 0
      %p133 = por %p131, %p132
      %p134 = scmp.ne.s32.totalorder %s126, %s128
      %p135 = scmp.eq.s32.totalorder %s29, 1
      %p136 = por %p134, %p135
      %p137 = scmp.ne.s32.totalorder %s128, %s129
      %p138 = scmp.eq.s32.totalorder %s29, 0
      %p139 = por %p137, %p138
      %p140 = scmp.ne.s32.totalorder %s128, %s129
      %p141 = scmp.eq.s32.totalorder %s30, 1
      %p142 = por %p140, %p141
      %p144 = scmp.ne.s32.totalorder %s129, %s143
      %p145 = scmp.eq.s32.totalorder %s30, 0
      %p146 = por %p144, %p145
      %s148 = sadd.s32 %s147, 1
      %p151 = scmp.eq.s32.totalorder %s24, 1
      %p152 = scmp.ne.s32.totalorder %s147, %s149
      %p153 = scmp.eq.s32.totalorder %s24, 0
      %p154 = por %p152, %p153
      %p155 = scmp.ne.s32.totalorder %s147, %s149
      %p156 = scmp.eq.s32.totalorder %s29, 1
      %p157 = por %p155, %p156
      %p158 = scmp.ne.s32.totalorder %s149, %s150
      %p159 = scmp.eq.s32.totalorder %s29, 0
      %p160 = por %p158, %p159
      %p161 = scmp.ne.s32.totalorder %s149, %s150
      %p162 = scmp.eq.s32.totalorder %s30, 1
      %p163 = por %p161, %p162
      %p165 = scmp.ne.s32.totalorder %s150, %s164
      %p166 = scmp.eq.s32.totalorder %s30, 0
      %p167 = por %p165, %p166
      %s169 = sadd.s32 %s168, 1
      %p172 = scmp.eq.s32.totalorder %s24, 1
      %p173 = scmp.ne.s32.totalorder %s168, %s170
      %p174 = scmp.eq.s32.totalorder %s24, 0
      %p175 = por %p173, %p174
      %p176 = scmp.ne.s32.totalorder %s168, %s170
      %p177 = scmp.eq.s32.totalorder %s29, 1
      %p178 = por %p176, %p177
      %p179 = scmp.ne.s32.totalorder %s170, %s171
      %p180 = scmp.eq.s32.totalorder %s29, 0
      %p181 = por %p179, %p180
      %p182 = scmp.ne.s32.totalorder %s170, %s171
      %p183 = scmp.eq.s32.totalorder %s30, 1
      %p184 = por %p182, %p183
      %p186 = scmp.ne.s32.totalorder %s171, %s185
      %p187 = scmp.eq.s32.totalorder %s30, 0
      %p188 = por %p186, %p187
      %s190 = sadd.s32 %s189, 1
      %p193 = scmp.eq.s32.totalorder %s24, 1
      %p194 = scmp.ne.s32.totalorder %s189, %s191
      %p195 = scmp.eq.s32.totalorder %s24, 0
      %p196 = por %p194, %p195
      %p197 = scmp.ne.s32.totalorder %s189, %s191
      %p198 = scmp.eq.s32.totalorder %s29, 1
      %p199 = por %p197, %p198
      %p200 = scmp.ne.s32.totalorder %s191, %s192
      %p201 = scmp.eq.s32.totalorder %s29, 0
      %p202 = por %p200, %p201
      %p203 = scmp.ne.s32.totalorder %s191, %s192
      %p204 = scmp.eq.s32.totalorder %s30, 1
      %p205 = por %p203, %p204
      %p207 = scmp.ne.s32.totalorder %s192, %s206
      %p208 = scmp.eq.s32.totalorder %s30, 0
      %p209 = por %p207, %p208
      %s211 = sadd.s32 %s210, 1
      %p214 = scmp.eq.s32.totalorder %s24, 1
      %p215 = scmp.ne.s32.totalorder %s210, %s212
      %p216 = scmp.eq.s32.totalorder %s24, 0
      %p217 = por %p215, %p216
      %p218 = scmp.ne.s32.totalorder %s210, %s212
      %p219 = scmp.eq.s32.totalorder %s29, 1
      %p220 = por %p218, %p219
      %p221 = scmp.ne.s32.totalorder %s212, %s213
      %p222 = scmp.eq.s32.totalorder %s29, 0
      %p223 = por %p221, %p222
      %p224 = scmp.ne.s32.totalorder %s212, %s213
      %p225 = scmp.eq.s32.totalorder %s30, 1
      %p226 = por %p224, %p225
      %p228 = scmp.ne.s32.totalorder %s213, %s227
      %p229 = scmp.eq.s32.totalorder %s30, 0
      %p230 = por %p228, %p229
      %s231 = ssub.s32 %s24, %s31
      %p232 = scmp.eq.s32.totalorder %s231, 0
      %s234 = sadd.s32 %s233, 1
      %s235 = scalar_select %p232, %s233, %s234
      %p238 = pneg %p232
      %p239 = scmp.eq.s32.totalorder %s24, 1
      %p240 = por %p238, %p239
      %p241 = scmp.ne.s32.totalorder %s233, %s236
      %p242 = scmp.eq.s32.totalorder %s24, 0
      %p243 = por %p241, %p242
      %p244 = scmp.ne.s32.totalorder %s233, %s236
      %p245 = scmp.eq.s32.totalorder %s29, 1
      %p246 = por %p244, %p245
      %p247 = scmp.ne.s32.totalorder %s236, %s237
      %p248 = scmp.eq.s32.totalorder %s29, 0
      %p249 = por %p247, %p248
      %p250 = scmp.ne.s32.totalorder %s236, %s237
      %p251 = scmp.eq.s32.totalorder %s30, 1
      %p252 = por %p250, %p251
      %p254 = scmp.ne.s32.totalorder %s237, %s253
      %p255 = scmp.eq.s32.totalorder %s30, 0
      %p256 = por %p254, %p255
      %p257 = scmp.le.s32.totalorder 1, %s24
      %p258 = scmp.lt.s32.totalorder %s24, 3
      %p259 = pnand %p257, %p258
      %p260 = pneg %p259
      // Predicated region
      $region9: #{tpu_custom_call.1} parent=5 // pred_check
        _
      $region10: #{tpu_custom_call.1} parent=5 // pred_check_branch
        %262 = sbr.rel (%p259) target = $region12
      $region11: #{tpu_custom_call.1} parent=5 // pred_region
        %s263 = ssub.s32 %s24, 1
        // Predicated region
        $region13: #{tpu_custom_call.1} parent=11 // pred_check
          %p264 = pneg %p97
        $region14: #{tpu_custom_call.1} parent=11 // pred_check_branch
          %266 = sbr.rel (%p264) target = $region16
        $region15: #{tpu_custom_call.1} parent=11 // pred_region
          _
        $region16: #{tpu_custom_call.1} parent=11 // pred_fallthru
          _
        // Predicated region
        $region17: #{tpu_custom_call.1} parent=11 // pred_check
          %p267 = pneg %p118
        $region18: #{tpu_custom_call.1} parent=11 // pred_check_branch
          %269 = sbr.rel (%p267) target = $region20
        $region19: #{tpu_custom_call.1} parent=11 // pred_region
          _
        $region20: #{tpu_custom_call.1} parent=11 // pred_fallthru
          _
        // Predicated region
        $region21: #{tpu_custom_call.1} parent=11 // pred_check
          %p270 = pneg %p139
        $region22: #{tpu_custom_call.1} parent=11 // pred_check_branch
          %272 = sbr.rel (%p270) target = $region24
        $region23: #{tpu_custom_call.1} parent=11 // pred_region
          _
        $region24: #{tpu_custom_call.1} parent=11 // pred_fallthru
          _
        // Predicated region
        $region25: #{tpu_custom_call.1} parent=11 // pred_check
          %p273 = pneg %p160
        $region26: #{tpu_custom_call.1} parent=11 // pred_check_branch
          %275 = sbr.rel (%p273) target = $region28
        $region27: #{tpu_custom_call.1} parent=11 // pred_region
          _
        $region28: #{tpu_custom_call.1} parent=11 // pred_fallthru
          _
        // Predicated region
        $region29: #{tpu_custom_call.1} parent=11 // pred_check
          %p276 = pneg %p181
        $region30: #{tpu_custom_call.1} parent=11 // pred_check_branch
          %278 = sbr.rel (%p276) target = $region32
        $region31: #{tpu_custom_call.1} parent=11 // pred_region
          _
        $region32: #{tpu_custom_call.1} parent=11 // pred_fallthru
          _
        // Predicated region
        $region33: #{tpu_custom_call.1} parent=11 // pred_check
          %p279 = pneg %p202
        $region34: #{tpu_custom_call.1} parent=11 // pred_check_branch
          %281 = sbr.rel (%p279) target = $region36
        $region35: #{tpu_custom_call.1} parent=11 // pred_region
          _
        $region36: #{tpu_custom_call.1} parent=11 // pred_fallthru
          _
        // Predicated region
        $region37: #{tpu_custom_call.1} parent=11 // pred_check
          %p282 = pneg %p223
        $region38: #{tpu_custom_call.1} parent=11 // pred_check_branch
          %284 = sbr.rel (%p282) target = $region40
        $region39: #{tpu_custom_call.1} parent=11 // pred_region
          _
        $region40: #{tpu_custom_call.1} parent=11 // pred_fallthru
          _
      $region12: #{tpu_custom_call.1} parent=5 // pred_fallthru
        _
      %p285 = scmp.lt.s32.totalorder %s24, 2
      // Predicated region
      $region41: #{tpu_custom_call.1} parent=5 // pred_check
        %p286 = pneg %p285
      $region42: #{tpu_custom_call.1} parent=5 // pred_check_branch
        %288 = sbr.rel (%p286) target = $region44
      $region43: #{tpu_custom_call.1} parent=5 // pred_region
        // Predicated region
        $region45: #{tpu_custom_call.1} parent=43 // pred_check
          %p289 = pneg %p44
        $region46: #{tpu_custom_call.1} parent=43 // pred_check_branch
          %291 = sbr.rel (%p289) target = $region48
        $region47: #{tpu_custom_call.1} parent=43 // pred_region
          %s292 = sand.u32 %s34, 1
          %s293 = scalar_lea.sflag [#allocation3], %s292
          %s294 = sand.u32 %s34, 1
          %s295 = smul.addr %s294, 8
          %s296 = scalar_lea.vmem [#allocation2], %s295
          %s298 = ssub.s32 128, 128
          %299 = vsyncadd %s293, %s298
          %s300 = smul.addr %s24, 128
          %s301 = scalar_lea.hbm %s0, %s300
          %s303 = sshll.u32 %s296, 4
          %s304 = int_to_ptr.vmem [resolvable:$true] %s303
          %306 = dma.hbm_to_vmem [thread:$0]  %s301, 128, %s304, %s293
        $region48: #{tpu_custom_call.1} parent=43 // pred_fallthru
          _
        // Predicated region
        $region49: #{tpu_custom_call.1} parent=43 // pred_check
          %p307 = pneg %p70
        $region50: #{tpu_custom_call.1} parent=43 // pred_check_branch
          %309 = sbr.rel (%p307) target = $region52
        $region51: #{tpu_custom_call.1} parent=43 // pred_region
          %s310 = sand.u32 %s60, 1
          %s311 = scalar_lea.sflag [#allocation6], %s310
          %s312 = sand.u32 %s60, 1
          %s313 = smul.addr %s312, 8
          %s314 = scalar_lea.vmem [#allocation5], %s313
          %s316 = ssub.s32 128, 128
          %317 = vsyncadd %s311, %s316
          %s318 = smul.addr %s24, 128
          %s319 = scalar_lea.hbm %s1, %s318
          %s321 = sshll.u32 %s314, 4
          %s322 = int_to_ptr.vmem [resolvable:$true] %s321
          %324 = dma.hbm_to_vmem [thread:$0]  %s319, 128, %s322, %s311
        $region52: #{tpu_custom_call.1} parent=43 // pred_fallthru
          _
      $region44: #{tpu_custom_call.1} parent=5 // pred_fallthru
        _
      %p325 = scmp.le.s32.totalorder 1, %s24
      %p326 = scmp.lt.s32.totalorder %s24, 3
      %p327 = pnand %p325, %p326
      %p328 = pneg %p327
      // Predicated region
      $region53: #{tpu_custom_call.1} parent=5 // pred_check
        _
      $region54: #{tpu_custom_call.1} parent=5 // pred_check_branch
        %330 = sbr.rel (%p327) target = $region56
      $region55: #{tpu_custom_call.1} parent=5 // pred_region
        %s331 = ssub.s32 %s24, 1
        %s332 = sand.u32 %s37, 1
        %s333 = scalar_lea.sflag [#allocation3], %s332
        %s334 = sand.u32 %s37, 1
        %s335 = smul.addr %s334, 8
        %s336 = scalar_lea.vmem [#allocation2], %s335
        // Predicated region
        $region57: #{tpu_custom_call.1} parent=55 // pred_check
          %p337 = pneg %p50
        $region58: #{tpu_custom_call.1} parent=55 // pred_check_branch
          %339 = sbr.rel (%p337) target = $region60
        $region59: #{tpu_custom_call.1} parent=55 // pred_region
          %340 = dma.done %s333, 128
        $region60: #{tpu_custom_call.1} parent=55 // pred_fallthru
          _
        %s341 = sand.u32 %s63, 1
        %s342 = scalar_lea.sflag [#allocation6], %s341
        %s343 = sand.u32 %s63, 1
        %s344 = smul.addr %s343, 8
        %s345 = scalar_lea.vmem [#allocation5], %s344
        // Predicated region
        $region61: #{tpu_custom_call.1} parent=55 // pred_check
          %p346 = pneg %p76
        $region62: #{tpu_custom_call.1} parent=55 // pred_check_branch
          %348 = sbr.rel (%p346) target = $region64
        $region63: #{tpu_custom_call.1} parent=55 // pred_region
          %349 = dma.done %s342, 128
        $region64: #{tpu_custom_call.1} parent=55 // pred_fallthru
          _
        %s350 = sand.u32 %s37, 1
        %s351 = scalar_lea.sflag [#allocation3], %s350
        %s352 = sand.u32 %s37, 1
        %s353 = smul.addr %s352, 8
        %s354 = scalar_lea.vmem [#allocation2], %s353
        %p355 = pneg %p50
        %p356 = pneg %p47
        %s357 = sand.u32 %s63, 1
        %s358 = scalar_lea.sflag [#allocation6], %s357
        %s359 = sand.u32 %s63, 1
        %s360 = smul.addr %s359, 8
        %s361 = scalar_lea.vmem [#allocation5], %s360
        %p362 = pneg %p76
        %p363 = pneg %p73
        %p364 = pneg %p97
        %p365 = pneg %p94
        %p366 = pneg %p118
        %p367 = pneg %p115
        %p368 = pneg %p139
        %p369 = pneg %p136
        %p370 = pneg %p160
        %p371 = pneg %p157
        %p372 = pneg %p181
        %p373 = pneg %p178
        %p374 = pneg %p202
        %p375 = pneg %p199
        %p376 = pneg %p223
        %p377 = pneg %p220
        %p378 = pneg %p249
        %p379 = pneg %p246
        %s380 = sand.u32 %s236, 1
        %s381 = scalar_lea.sflag [#allocation4], %s380
        %s382 = sand.u32 %s236, 1
        %s383 = smul.addr %s382, 8
        %s384 = scalar_lea.vmem [#allocation7], %s383
        %v385 = vld [vmem:[%s336] sm:$0xff]
        %v386 = vld [vmem:[%s4] sm:$0xff]
        %v387 = vld [vmem:[%s4 + $0x8] sm:$0xff]
        %v388 = vld [vmem:[%s4 + $0x10] sm:$0xff]
        %v389 = vld [vmem:[%s4 + $0x18] sm:$0xff]
        %vm390 = vcmask 261120
        %v392 = vsel %vm390, %v385, 0
        %394 = vmatprep.subr.mxu0 0.0
        %395 = vmatpush1.msra.mxu0 %v386
        %396 = vmatprep.subr.mxu0 0.0
        %397 = vmatpush1.msra.mxu0 %v387
        %398 = vmatprep.subr.mxu0 0.0
        %399 = vmatpush1.msra.mxu0 %v388
        %400 = vmatprep.subr.mxu0 0.0
        %401 = vmatpush1.msra.mxu0 %v389
        %402 = vmatprep.subr.mxu0 0.0
        %403 = vmatpush1.msra.mxu0 0.0
        %404 = vmatprep.subr.mxu0 0.0
        %405 = vmatpush1.msra.mxu0 0.0
        %406 = vmatprep.subr.mxu0 0.0
        %407 = vmatpush1.msra.mxu0 0.0
        %408 = vmatprep.subr.mxu0 0.0
        %409 = vmatpush1.msra.mxu0 0.0
        %410 = vmatprep.subr.mxu0 0.0
        %411 = vmatpush1.msra.mxu0 0.0
        %412 = vmatprep.subr.mxu0 0.0
        %413 = vmatpush1.msra.mxu0 0.0
        %414 = vmatprep.subr.mxu0 0.0
        %415 = vmatpush1.msra.mxu0 0.0
        %416 = vmatprep.subr.mxu0 0.0
        %417 = vmatpush1.msra.mxu0 0.0
        %418 = vmatprep.subr.mxu0 0.0
        %419 = vmatpush1.msra.mxu0 0.0
        %420 = vmatprep.subr.mxu0 0.0
        %421 = vmatpush1.msra.mxu0 0.0
        %422 = vmatprep.subr.mxu0 0.0
        %423 = vmatpush1.msra.mxu0 0.0
        %424 = vmatprep.subr.mxu0 0.0
        %425 = vmatpush1.msra.mxu0 0.0
        %426 = vmatprep.subr.mxu0 0.0
        %427 = vmatpush1.msra.mxu0 0.0
        %428 = vmatprep.subr.mxu0 0.0
        %429 = vmatpush1.msra.mxu0 0.0
        %430 = vmatprep.subr.mxu0 0.0
        %431 = vmatpush1.msra.mxu0 0.0
        %432 = vmatprep.subr.mxu0 0.0
        %433 = vmatpush1.msra.mxu0 0.0
        %434 = vmatprep.subr.mxu0 0.0
        %435 = vmatpush1.msra.mxu0 0.0
        %436 = vmatprep.subr.mxu0 0.0
        %437 = vmatpush1.msra.mxu0 0.0
        %438 = vmatprep.subr.mxu0 0.0
        %439 = vmatpush1.msra.mxu0 0.0
        %440 = vmatprep.subr.mxu0 0.0
        %441 = vmatpush1.msra.mxu0 0.0
        %442 = vmatprep.subr.mxu0 0.0
        %443 = vmatpush1.msra.mxu0 0.0
        %444 = vmatprep.subr.mxu0 0.0
        %445 = vmatpush1.msra.mxu0 0.0
        %446 = vmatprep.subr.mxu0 0.0
        %447 = vmatpush1.msra.mxu0 0.0
        %448 = vmatprep.subr.mxu0 0.0
        %449 = vmatpush1.msra.mxu0 0.0
        %450 = vmatprep.subr.mxu0 0.0
        %451 = vmatpush1.msra.mxu0 0.0
        %452 = vmatprep.subr.mxu0 0.0
        %453 = vmatpush1.msra.mxu0 0.0
        %454 = vmatprep.subr.mxu0 0.0
        %455 = vmatpush1.msra.mxu0 0.0
        %456 = vmatprep.subr.mxu0 0.0
        %457 = vmatpush1.msra.mxu0 0.0
        %458 = vmatprep.mubr.f32.mxu0 0.0
        %459 = vmatmul.mubr.f32.gmra.mrb[0].mxu0 %v392
        %v460 = vpop.f32.mrb[0].mxu0
        %v461 = vadd.f32 0.0, %v460
        %v462 = vpop.f32.mrb[0].mxu0
        %463 = vdwg.mxu0
        %v464 = vld [vmem:[%s345] sm:$0xff]
        %v465 = vld [vmem:[%s5] sm:$0xff]
        %v466 = vld [vmem:[%s5 + $0x8] sm:$0xff]
        %v467 = vld [vmem:[%s5 + $0x10] sm:$0xff]
        %v468 = vld [vmem:[%s5 + $0x18] sm:$0xff]
        %v470 = vsel %vm390, %v464, 0
        %472 = vmatprep.subr.mxu0 0.0
        %473 = vmatpush1.msra.mxu0 %v465
        %474 = vmatprep.subr.mxu0 0.0
        %475 = vmatpush1.msra.mxu0 %v466
        %476 = vmatprep.subr.mxu0 0.0
        %477 = vmatpush1.msra.mxu0 %v467
        %478 = vmatprep.subr.mxu0 0.0
        %479 = vmatpush1.msra.mxu0 %v468
        %480 = vmatprep.subr.mxu0 0.0
        %481 = vmatpush1.msra.mxu0 0.0
        %482 = vmatprep.subr.mxu0 0.0
        %483 = vmatpush1.msra.mxu0 0.0
        %484 = vmatprep.subr.mxu0 0.0
        %485 = vmatpush1.msra.mxu0 0.0
        %486 = vmatprep.subr.mxu0 0.0
        %487 = vmatpush1.msra.mxu0 0.0
        %488 = vmatprep.subr.mxu0 0.0
        %489 = vmatpush1.msra.mxu0 0.0
        %490 = vmatprep.subr.mxu0 0.0
        %491 = vmatpush1.msra.mxu0 0.0
        %492 = vmatprep.subr.mxu0 0.0
        %493 = vmatpush1.msra.mxu0 0.0
        %494 = vmatprep.subr.mxu0 0.0
        %495 = vmatpush1.msra.mxu0 0.0
        %496 = vmatprep.subr.mxu0 0.0
        %497 = vmatpush1.msra.mxu0 0.0
        %498 = vmatprep.subr.mxu0 0.0
        %499 = vmatpush1.msra.mxu0 0.0
        %500 = vmatprep.subr.mxu0 0.0
        %501 = vmatpush1.msra.mxu0 0.0
        %502 = vmatprep.subr.mxu0 0.0
        %503 = vmatpush1.msra.mxu0 0.0
        %504 = vmatprep.subr.mxu0 0.0
        %505 = vmatpush1.msra.mxu0 0.0
        %506 = vmatprep.subr.mxu0 0.0
        %507 = vmatpush1.msra.mxu0 0.0
        %508 = vmatprep.subr.mxu0 0.0
        %509 = vmatpush1.msra.mxu0 0.0
        %510 = vmatprep.subr.mxu0 0.0
        %511 = vmatpush1.msra.mxu0 0.0
        %512 = vmatprep.subr.mxu0 0.0
        %513 = vmatpush1.msra.mxu0 0.0
        %514 = vmatprep.subr.mxu0 0.0
        %515 = vmatpush1.msra.mxu0 0.0
        %516 = vmatprep.subr.mxu0 0.0
        %517 = vmatpush1.msra.mxu0 0.0
        %518 = vmatprep.subr.mxu0 0.0
        %519 = vmatpush1.msra.mxu0 0.0
        %520 = vmatprep.subr.mxu0 0.0
        %521 = vmatpush1.msra.mxu0 0.0
        %522 = vmatprep.subr.mxu0 0.0
        %523 = vmatpush1.msra.mxu0 0.0
        %524 = vmatprep.subr.mxu0 0.0
        %525 = vmatpush1.msra.mxu0 0.0
        %526 = vmatprep.subr.mxu0 0.0
        %527 = vmatpush1.msra.mxu0 0.0
        %528 = vmatprep.subr.mxu0 0.0
        %529 = vmatpush1.msra.mxu0 0.0
        %530 = vmatprep.subr.mxu0 0.0
        %531 = vmatpush1.msra.mxu0 0.0
        %532 = vmatprep.subr.mxu0 0.0
        %533 = vmatpush1.msra.mxu0 0.0
        %534 = vmatprep.subr.mxu0 0.0
        %535 = vmatpush1.msra.mxu0 0.0
        %536 = vmatprep.mubr.f32.mxu0 0.0
        %537 = vmatmul.mubr.f32.gmra.mrb[0].mxu0 %v470
        %v538 = vpop.f32.mrb[0].mxu0
        %v539 = vadd.f32 0.0, %v538
        %v540 = vpop.f32.mrb[0].mxu0
        %541 = vdwg.mxu0
        %v542 = vld [vmem:[%s6] sm:$0xff]
        %v543 = vld [vmem:[%s6 + $0x8] sm:$0xff]
        %v544 = vld [vmem:[%s6 + $0x10] sm:$0xff]
        %v545 = vld [vmem:[%s6 + $0x18] sm:$0xff]
        %546 = vmatprep.subr.mxu0 0.0
        %547 = vmatpush1.msra.mxu0 %v542
        %548 = vmatprep.subr.mxu0 0.0
        %549 = vmatpush1.msra.mxu0 %v543
        %550 = vmatprep.subr.mxu0 0.0
        %551 = vmatpush1.msra.mxu0 %v544
        %552 = vmatprep.subr.mxu0 0.0
        %553 = vmatpush1.msra.mxu0 %v545
        %554 = vmatprep.subr.mxu0 0.0
        %555 = vmatpush1.msra.mxu0 0.0
        %556 = vmatprep.subr.mxu0 0.0
        %557 = vmatpush1.msra.mxu0 0.0
        %558 = vmatprep.subr.mxu0 0.0
        %559 = vmatpush1.msra.mxu0 0.0
        %560 = vmatprep.subr.mxu0 0.0
        %561 = vmatpush1.msra.mxu0 0.0
        %562 = vmatprep.subr.mxu0 0.0
        %563 = vmatpush1.msra.mxu0 0.0
        %564 = vmatprep.subr.mxu0 0.0
        %565 = vmatpush1.msra.mxu0 0.0
        %566 = vmatprep.subr.mxu0 0.0
        %567 = vmatpush1.msra.mxu0 0.0
        %568 = vmatprep.subr.mxu0 0.0
        %569 = vmatpush1.msra.mxu0 0.0
        %570 = vmatprep.subr.mxu0 0.0
        %571 = vmatpush1.msra.mxu0 0.0
        %572 = vmatprep.subr.mxu0 0.0
        %573 = vmatpush1.msra.mxu0 0.0
        %574 = vmatprep.subr.mxu0 0.0
        %575 = vmatpush1.msra.mxu0 0.0
        %576 = vmatprep.subr.mxu0 0.0
        %577 = vmatpush1.msra.mxu0 0.0
        %578 = vmatprep.subr.mxu0 0.0
        %579 = vmatpush1.msra.mxu0 0.0
        %580 = vmatprep.subr.mxu0 0.0
        %581 = vmatpush1.msra.mxu0 0.0
        %582 = vmatprep.subr.mxu0 0.0
        %583 = vmatpush1.msra.mxu0 0.0
        %584 = vmatprep.subr.mxu0 0.0
        %585 = vmatpush1.msra.mxu0 0.0
        %586 = vmatprep.subr.mxu0 0.0
        %587 = vmatpush1.msra.mxu0 0.0
        %588 = vmatprep.subr.mxu0 0.0
        %589 = vmatpush1.msra.mxu0 0.0
        %590 = vmatprep.subr.mxu0 0.0
        %591 = vmatpush1.msra.mxu0 0.0
        %592 = vmatprep.subr.mxu0 0.0
        %593 = vmatpush1.msra.mxu0 0.0
        %594 = vmatprep.subr.mxu0 0.0
        %595 = vmatpush1.msra.mxu0 0.0
        %596 = vmatprep.subr.mxu0 0.0
        %597 = vmatpush1.msra.mxu0 0.0
        %598 = vmatprep.subr.mxu0 0.0
        %599 = vmatpush1.msra.mxu0 0.0
        %600 = vmatprep.subr.mxu0 0.0
        %601 = vmatpush1.msra.mxu0 0.0
        %602 = vmatprep.subr.mxu0 0.0
        %603 = vmatpush1.msra.mxu0 0.0
        %604 = vmatprep.subr.mxu0 0.0
        %605 = vmatpush1.msra.mxu0 0.0
        %606 = vmatprep.subr.mxu0 0.0
        %607 = vmatpush1.msra.mxu0 0.0
        %608 = vmatprep.subr.mxu0 0.0
        %609 = vmatpush1.msra.mxu0 0.0
        %610 = vmatprep.mubr.f32.mxu0 0.0
        %611 = vmatmul.mubr.f32.gmra.mrb[0].mxu0 %v470
        %v612 = vpop.f32.mrb[0].mxu0
        %v613 = vadd.f32 0.0, %v612
        %v614 = vpop.f32.mrb[0].mxu0
        %615 = vdwg.mxu0
        %vm616 = vcmask 523264
        %v618 = vsel %vm616, %v461, 0
        %v621 = vsel %vm616, %v539, 0
        %623 = vmatprep.subr.mxu0 0.0
        %624 = vmatpush1.xpose.msra.mxu0 %v621
        %625 = vmatprep.subr.mxu0 0.0
        %626 = vmatpush1.xpose.msra.mxu0 0.0
        %627 = vmatprep.subr.mxu0 0.0
        %628 = vmatpush1.xpose.msra.mxu0 0.0
        %629 = vmatprep.subr.mxu0 0.0
        %630 = vmatpush1.xpose.msra.mxu0 0.0
        %631 = vmatprep.subr.mxu0 0.0
        %632 = vmatpush1.xpose.msra.mxu0 0.0
        %633 = vmatprep.subr.mxu0 0.0
        %634 = vmatpush1.xpose.msra.mxu0 0.0
        %635 = vmatprep.subr.mxu0 0.0
        %636 = vmatpush1.xpose.msra.mxu0 0.0
        %637 = vmatprep.subr.mxu0 0.0
        %638 = vmatpush1.xpose.msra.mxu0 0.0
        %639 = vmatprep.subr.mxu0 0.0
        %640 = vmatpush1.xpose.msra.mxu0 0.0
        %641 = vmatprep.subr.mxu0 0.0
        %642 = vmatpush1.xpose.msra.mxu0 0.0
        %643 = vmatprep.subr.mxu0 0.0
        %644 = vmatpush1.xpose.msra.mxu0 0.0
        %645 = vmatprep.subr.mxu0 0.0
        %646 = vmatpush1.xpose.msra.mxu0 0.0
        %647 = vmatprep.subr.mxu0 0.0
        %648 = vmatpush1.xpose.msra.mxu0 0.0
        %649 = vmatprep.subr.mxu0 0.0
        %650 = vmatpush1.xpose.msra.mxu0 0.0
        %651 = vmatprep.subr.mxu0 0.0
        %652 = vmatpush1.xpose.msra.mxu0 0.0
        %653 = vmatprep.subr.mxu0 0.0
        %654 = vmatpush1.xpose.msra.mxu0 0.0
        %655 = vmatprep.subr.mxu0 0.0
        %656 = vmatpush1.xpose.msra.mxu0 0.0
        %657 = vmatprep.subr.mxu0 0.0
        %658 = vmatpush1.xpose.msra.mxu0 0.0
        %659 = vmatprep.subr.mxu0 0.0
        %660 = vmatpush1.xpose.msra.mxu0 0.0
        %661 = vmatprep.subr.mxu0 0.0
        %662 = vmatpush1.xpose.msra.mxu0 0.0
        %663 = vmatprep.subr.mxu0 0.0
        %664 = vmatpush1.xpose.msra.mxu0 0.0
        %665 = vmatprep.subr.mxu0 0.0
        %666 = vmatpush1.xpose.msra.mxu0 0.0
        %667 = vmatprep.subr.mxu0 0.0
        %668 = vmatpush1.xpose.msra.mxu0 0.0
        %669 = vmatprep.subr.mxu0 0.0
        %670 = vmatpush1.xpose.msra.mxu0 0.0
        %671 = vmatprep.subr.mxu0 0.0
        %672 = vmatpush1.xpose.msra.mxu0 0.0
        %673 = vmatprep.subr.mxu0 0.0
        %674 = vmatpush1.xpose.msra.mxu0 0.0
        %675 = vmatprep.subr.mxu0 0.0
        %676 = vmatpush1.xpose.msra.mxu0 0.0
        %677 = vmatprep.subr.mxu0 0.0
        %678 = vmatpush1.xpose.msra.mxu0 0.0
        %679 = vmatprep.subr.mxu0 0.0
        %680 = vmatpush1.xpose.msra.mxu0 0.0
        %681 = vmatprep.subr.mxu0 0.0
        %682 = vmatpush1.xpose.msra.mxu0 0.0
        %683 = vmatprep.subr.mxu0 0.0
        %684 = vmatpush1.xpose.msra.mxu0 0.0
        %685 = vmatprep.subr.mxu0 0.0
        %686 = vmatpush1.xpose.msra.mxu0 0.0
        %687 = vmatprep.mubr.f32.mxu0 0.0
        %688 = vmatmul.mubr.f32.gmra.mrb[0].mxu0 %v618
        %v689 = vpop.f32.mrb[0].mxu0
        %v690 = vadd.f32 0.0, %v689
        %v691 = vpop.f32.mrb[0].mxu0
        %692 = vdwg.mxu0
        %v693 = vld [vmem:[%s2] sm:$0xff]
        %v694 = vld [vmem:[%s3] sm:$0x1]
        %695 = vset.pattern.permute.xlu0 0
        %696 = vperm.xlu0 %695, %v693
        %v697 = vpop.permute.xlu0 %696
        %v698 = vlaneseq
        %v699 = vshrl.u32 %v698, 7
        %v700 = vsub.s32 0, %v699
        %v701 = vrot.slane %v694, %v700
        %vm702 = vcmp.eq.s32.totalorder %v697, %v701
        %v703 = vsel %vm702, %v690, -1e+30
        %vm704 = vcmask 64512
        %v705 = vsel %vm704, %v703, -inf
        %706 = vmax.xlane.f32.xlu0 %v705
        %v707 = vpop.xlane.xlu0 %706
        %v708 = vsub.f32 %v703, %v707
        %v709 = vmul.f32 %v708, 1.442695
        %v710 = vpow.pop %v709
        %v711 = vsel %vm704, %v710, 0.0
        %712 = vadd.xlane.f32.xlu0 %v711
        %v713 = vpop.xlane.xlu0 %712
        %v714 = vrcp.pop %v713
        %v715 = vmul.f32 %v710, %v714
        %v717 = vsel %vm704, %v715, 0
        %719 = vmatprep.subr.mxu0 0.0
        %720 = vmatpush1.msra.mxu0 %v613
        %721 = vmatprep.subr.mxu0 0.0
        %722 = vmatpush1.msra.mxu0 0.0
        %723 = vmatprep.subr.mxu0 0.0
        %724 = vmatpush1.msra.mxu0 0.0
        %725 = vmatprep.subr.mxu0 0.0
        %726 = vmatpush1.msra.mxu0 0.0
        %727 = vmatprep.subr.mxu0 0.0
        %728 = vmatpush1.msra.mxu0 0.0
        %729 = vmatprep.subr.mxu0 0.0
        %730 = vmatpush1.msra.mxu0 0.0
        %731 = vmatprep.subr.mxu0 0.0
        %732 = vmatpush1.msra.mxu0 0.0
        %733 = vmatprep.subr.mxu0 0.0
        %734 = vmatpush1.msra.mxu0 0.0
        %735 = vmatprep.subr.mxu0 0.0
        %736 = vmatpush1.msra.mxu0 0.0
        %737 = vmatprep.subr.mxu0 0.0
        %738 = vmatpush1.msra.mxu0 0.0
        %739 = vmatprep.subr.mxu0 0.0
        %740 = vmatpush1.msra.mxu0 0.0
        %741 = vmatprep.subr.mxu0 0.0
        %742 = vmatpush1.msra.mxu0 0.0
        %743 = vmatprep.subr.mxu0 0.0
        %744 = vmatpush1.msra.mxu0 0.0
        %745 = vmatprep.subr.mxu0 0.0
        %746 = vmatpush1.msra.mxu0 0.0
        %747 = vmatprep.subr.mxu0 0.0
        %748 = vmatpush1.msra.mxu0 0.0
        %749 = vmatprep.subr.mxu0 0.0
        %750 = vmatpush1.msra.mxu0 0.0
        %751 = vmatprep.subr.mxu0 0.0
        %752 = vmatpush1.msra.mxu0 0.0
        %753 = vmatprep.subr.mxu0 0.0
        %754 = vmatpush1.msra.mxu0 0.0
        %755 = vmatprep.subr.mxu0 0.0
        %756 = vmatpush1.msra.mxu0 0.0
        %757 = vmatprep.subr.mxu0 0.0
        %758 = vmatpush1.msra.mxu0 0.0
        %759 = vmatprep.subr.mxu0 0.0
        %760 = vmatpush1.msra.mxu0 0.0
        %761 = vmatprep.subr.mxu0 0.0
        %762 = vmatpush1.msra.mxu0 0.0
        %763 = vmatprep.subr.mxu0 0.0
        %764 = vmatpush1.msra.mxu0 0.0
        %765 = vmatprep.subr.mxu0 0.0
        %766 = vmatpush1.msra.mxu0 0.0
        %767 = vmatprep.subr.mxu0 0.0
        %768 = vmatpush1.msra.mxu0 0.0
        %769 = vmatprep.subr.mxu0 0.0
        %770 = vmatpush1.msra.mxu0 0.0
        %771 = vmatprep.subr.mxu0 0.0
        %772 = vmatpush1.msra.mxu0 0.0
        %773 = vmatprep.subr.mxu0 0.0
        %774 = vmatpush1.msra.mxu0 0.0
        %775 = vmatprep.subr.mxu0 0.0
        %776 = vmatpush1.msra.mxu0 0.0
        %777 = vmatprep.subr.mxu0 0.0
        %778 = vmatpush1.msra.mxu0 0.0
        %779 = vmatprep.subr.mxu0 0.0
        %780 = vmatpush1.msra.mxu0 0.0
        %781 = vmatprep.subr.mxu0 0.0
        %782 = vmatpush1.msra.mxu0 0.0
        %783 = vmatprep.mubr.f32.mxu0 0.0
        %784 = vmatmul.mubr.f32.gmra.mrb[0].mxu0 %v717
        %v785 = vpop.f32.mrb[0].mxu0
        %v786 = vadd.f32 0.0, %v785
        %v787 = vpop.f32.mrb[0].mxu0
        %788 = vdwg.mxu0
        %v789 = vld [vmem:[%s7] sm:$0xff]
        %v790 = vld [vmem:[%s7 + $0x8] sm:$0xff]
        %v791 = vld [vmem:[%s7 + $0x10] sm:$0xff]
        %v792 = vld [vmem:[%s7 + $0x18] sm:$0xff]
        %v793 = vld [vmem:[%s7 + $0x20] sm:$0xff]
        %v794 = vld [vmem:[%s7 + $0x28] sm:$0xff]
        %v795 = vld [vmem:[%s7 + $0x30] sm:$0xff]
        %v796 = vld [vmem:[%s7 + $0x38] sm:$0xff]
        %v797 = vld [vmem:[%s8] sm:$0x1]
        %v799 = vlaneseq
        %v800 = vshrl.u32 %v799, 7
        %v801 = vsub.s32 0, %v800
        %v802 = vrot.slane %v797, %v801
        %v805 = vsel %vm616, %v786, 0
        %807 = vmatprep.subr.mxu0 0.0
        %808 = vmatpush1.msra.mxu0 %v789
        %809 = vmatprep.subr.mxu0 0.0
        %810 = vmatpush1.msra.mxu0 %v790
        %811 = vmatprep.subr.mxu0 0.0
        %812 = vmatpush1.msra.mxu0 %v791
        %813 = vmatprep.subr.mxu0 0.0
        %814 = vmatpush1.msra.mxu0 %v792
        %815 = vmatprep.subr.mxu0 0.0
        %816 = vmatpush1.msra.mxu0 %v793
        %817 = vmatprep.subr.mxu0 0.0
        %818 = vmatpush1.msra.mxu0 %v794
        %819 = vmatprep.subr.mxu0 0.0
        %820 = vmatpush1.msra.mxu0 %v795
        %821 = vmatprep.subr.mxu0 0.0
        %822 = vmatpush1.msra.mxu0 %v796
        %823 = vmatprep.subr.mxu0 0.0
        %824 = vmatpush1.msra.mxu0 0.0
        %825 = vmatprep.subr.mxu0 0.0
        %826 = vmatpush1.msra.mxu0 0.0
        %827 = vmatprep.subr.mxu0 0.0
        %828 = vmatpush1.msra.mxu0 0.0
        %829 = vmatprep.subr.mxu0 0.0
        %830 = vmatpush1.msra.mxu0 0.0
        %831 = vmatprep.subr.mxu0 0.0
        %832 = vmatpush1.msra.mxu0 0.0
        %833 = vmatprep.subr.mxu0 0.0
        %834 = vmatpush1.msra.mxu0 0.0
        %835 = vmatprep.subr.mxu0 0.0
        %836 = vmatpush1.msra.mxu0 0.0
        %837 = vmatprep.subr.mxu0 0.0
        %838 = vmatpush1.msra.mxu0 0.0
        %839 = vmatprep.subr.mxu0 0.0
        %840 = vmatpush1.msra.mxu0 0.0
        %841 = vmatprep.subr.mxu0 0.0
        %842 = vmatpush1.msra.mxu0 0.0
        %843 = vmatprep.subr.mxu0 0.0
        %844 = vmatpush1.msra.mxu0 0.0
        %845 = vmatprep.subr.mxu0 0.0
        %846 = vmatpush1.msra.mxu0 0.0
        %847 = vmatprep.subr.mxu0 0.0
        %848 = vmatpush1.msra.mxu0 0.0
        %849 = vmatprep.subr.mxu0 0.0
        %850 = vmatpush1.msra.mxu0 0.0
        %851 = vmatprep.subr.mxu0 0.0
        %852 = vmatpush1.msra.mxu0 0.0
        %853 = vmatprep.subr.mxu0 0.0
        %854 = vmatpush1.msra.mxu0 0.0
        %855 = vmatprep.subr.mxu0 0.0
        %856 = vmatpush1.msra.mxu0 0.0
        %857 = vmatprep.subr.mxu0 0.0
        %858 = vmatpush1.msra.mxu0 0.0
        %859 = vmatprep.subr.mxu0 0.0
        %860 = vmatpush1.msra.mxu0 0.0
        %861 = vmatprep.subr.mxu0 0.0
        %862 = vmatpush1.msra.mxu0 0.0
        %863 = vmatprep.subr.mxu0 0.0
        %864 = vmatpush1.msra.mxu0 0.0
        %865 = vmatprep.subr.mxu0 0.0
        %866 = vmatpush1.msra.mxu0 0.0
        %867 = vmatprep.subr.mxu0 0.0
        %868 = vmatpush1.msra.mxu0 0.0
        %869 = vmatprep.subr.mxu0 0.0
        %870 = vmatpush1.msra.mxu0 0.0
        %871 = vmatprep.mubr.f32.mxu0 0.0
        %872 = vmatmul.mubr.f32.gmra.mrb[0].mxu0 %v805
        %v873 = vpop.f32.mrb[0].mxu0
        %v874 = vadd.f32 %v802, %v873
        %v875 = vpop.f32.mrb[0].mxu0
        %876 = vdwg.mxu0
        %877 = vst.msk [vmem:[%s384] sm:$0xff] %vm390, %v874
        %s878 = sand.u32 %s236, 1
        %s879 = scalar_lea.sflag [#allocation4], %s878
        %s880 = sand.u32 %s236, 1
        %s881 = smul.addr %s880, 8
        %s882 = scalar_lea.vmem [#allocation7], %s881
        // Predicated region
        $region65: #{tpu_custom_call.1} parent=55 // pred_check
          %p883 = pneg %p246
        $region66: #{tpu_custom_call.1} parent=55 // pred_check_branch
          %885 = sbr.rel (%p883) target = $region68
        $region67: #{tpu_custom_call.1} parent=55 // pred_region
          %s887 = ssub.s32 128, 128
          %888 = vsyncadd %s879, %s887
          %s889 = smul.addr %s29, 128
          %s890 = scalar_lea.hbm %s9, %s889
          %s892 = sshll.u32 %s882, 4
          %s893 = int_to_ptr.vmem [resolvable:$true] %s892
          %895 = dma.vmem_to_hbm [thread:$0]  %s893, 128, %s890, %s879
        $region68: #{tpu_custom_call.1} parent=55 // pred_fallthru
          _
      $region56: #{tpu_custom_call.1} parent=5 // pred_fallthru
        _
      %p896 = scmp.le.s32.totalorder 2, %s24
      // Predicated region
      $region69: #{tpu_custom_call.1} parent=5 // pred_check
        %p897 = pneg %p896
      $region70: #{tpu_custom_call.1} parent=5 // pred_check_branch
        %899 = sbr.rel (%p897) target = $region72
      $region71: #{tpu_custom_call.1} parent=5 // pred_region
        %s900 = ssub.s32 %s24, 2
        // Predicated region
        $region73: #{tpu_custom_call.1} parent=71 // pred_check
          %p901 = pneg %p252
        $region74: #{tpu_custom_call.1} parent=71 // pred_check_branch
          %903 = sbr.rel (%p901) target = $region76
        $region75: #{tpu_custom_call.1} parent=71 // pred_region
          %s904 = sand.u32 %s237, 1
          %s905 = scalar_lea.sflag [#allocation4], %s904
          %s906 = sand.u32 %s237, 1
          %s907 = smul.addr %s906, 8
          %s908 = scalar_lea.vmem [#allocation7], %s907
          %909 = dma.done %s905, 128
        $region76: #{tpu_custom_call.1} parent=71 // pred_fallthru
          _
      $region72: #{tpu_custom_call.1} parent=5 // pred_fallthru
        _
    $region6: #{tpu_custom_call.1} parent=1 // loop_footer
      %s28 = sadd.s32 1, %s24
    $region7: #{tpu_custom_call.1} parent=1 // loop_footer_branch
      %23 = sbr.rel target = $region3
    $region8: #{tpu_custom_call.1} parent=1 // loop_exit
      _
    %910 = vsyncpa [#allocation3], 1
    %s911 = scalar_lea.sflag [#allocation3], 1
    %912 = vsyncpa %s911, 1
    %913 = vsyncpa [#allocation6], 1
    %s914 = scalar_lea.sflag [#allocation6], 1
    %915 = vsyncpa %s914, 1
    %916 = vsyncpa [#allocation4], 1
    %s917 = scalar_lea.sflag [#allocation4], 1
    %918 = vsyncpa %s917, 1

</llo_original>
